<compile_context>
chip_gen: v7x
topology: tpu7x:2x2x1
jax: 0.10.0
libtpu: 0.0.40
codegen_flags: <defaults>
</compile_context>

<pallas_src>
import functools

import jax
import jax.numpy as jnp
from jax.experimental import pallas as pl
from jax.experimental.pallas import tpu as pltpu


def _round_up(a: int, b: int) -> int:
    return (a + b - 1) // b * b


def _switch_norm_kernel(x_ref, w_ref, b_ref, mw_ref, vw_ref,
                        y_ref, mbn_ref, vbn_ref,
                        *, eps, n_real, c_real):
    phase = pl.program_id(0)   # 0 = accumulate BN moments, 1 = normalize
    tile = pl.program_id(1)

    # Hoisted constant reciprocals (Python floats, folded at trace time).
    inv_n = 1.0 / n_real
    inv_nm1 = 1.0 / (n_real - 1.0)
    inv_c = 1.0 / c_real
    inv_cm1 = 1.0 / (c_real - 1.0)

    # ---- phase 0: accumulate per-feature sum / sum-of-squares --------------
    @pl.when(phase == 0)
    def _accumulate():
        @pl.when(tile == 0)
        def _init():
            mbn_ref[...] = jnp.zeros_like(mbn_ref)
            vbn_ref[...] = jnp.zeros_like(vbn_ref)

        x = x_ref[...].astype(jnp.float32)                      # (TILE_N, Cp)
        mbn_ref[...] += jnp.sum(x, axis=0, keepdims=True)       # running sum
        vbn_ref[...] += jnp.sum(x * x, axis=0, keepdims=True)   # running sumsq

    # ---- phase 1: finalize BN stats once, then normalize each tile ---------
    @pl.when(phase == 1)
    def _normalize():
        @pl.when(tile == 0)
        def _finalize():
            s = mbn_ref[...]
            ss = vbn_ref[...]
            mean_bn = s * inv_n
            var_bn = (ss - n_real * mean_bn * mean_bn) * inv_nm1
            mbn_ref[...] = mean_bn
            vbn_ref[...] = jnp.maximum(var_bn, 0.0)   # guard f32 cancellation

        x = x_ref[...].astype(jnp.float32)

        # Per-row (LN) stats via one-pass moments; padded feature columns are
        # zero so the sums only see the c_real real features.
        row_sum = jnp.sum(x, axis=1, keepdims=True)              # (TILE_N, 1)
        row_ssq = jnp.sum(x * x, axis=1, keepdims=True)
        mean_ln = row_sum * inv_c
        var_ln = jnp.maximum(
            (row_ssq - c_real * mean_ln * mean_ln) * inv_cm1, 0.0)

        mw0 = mw_ref[0]
        mw1 = mw_ref[1]
        vw0 = vw_ref[0]
        vw1 = vw_ref[1]

        # Mix at rank-1 (scale the (N,1) and (1,C) vectors) and broadcast once.
        mean = mw0 * mean_ln + mw1 * mbn_ref[...]                # (TILE_N, Cp)
        var = vw0 * var_ln + vw1 * vbn_ref[...]

        y = (x - mean) * jax.lax.rsqrt(var + eps)                # EUP rsqrt
        y = y * w_ref[...].astype(jnp.float32) + b_ref[...].astype(jnp.float32)
        y_ref[...] = y.astype(y_ref.dtype)


def switch_norm_1d(x, weight, bias, mean_weight, var_weight,
                   running_mean, running_var,
                   *, eps=1e-5, momentum=0.997, using_moving_average=True):
    """Training-mode SwitchNorm1d forward.

    Returns (y, new_running_mean, new_running_var).
    """
    n, c = x.shape
    if n < 2 or c < 2:
        raise ValueError("SwitchNorm1d needs N >= 2 and C >= 2 "
                         "(unbiased variance divides by N-1 / C-1)")

    # Lane-dense layout: pad features to a multiple of 128.  Padded columns are
    # zero and carry zero weight/bias, so they never influence real outputs.
    c_pad = _round_up(c, 128)

    # Batch tile: keep the double-buffered x / y tiles around ~8 MiB so the
    # pipeline fits comfortably inside scoped VMEM on v5e / v6e / v7x.
    bytes_per_row = c_pad * 4 * 4          # x tile + y tile, double-buffered f32
    tile_n = min(512, max(8, (8 * 1024 * 1024 // bytes_per_row) // 8 * 8))
    tile_n = min(tile_n, _round_up(n, 8))
    n_pad = _round_up(n, tile_n)
    num_tiles = n_pad // tile_n

    # Zero padding keeps the one-pass moments exact (zeros add nothing to the
    # sums; real N / C are used as divisors inside the kernel).
    x_p = jnp.pad(x, ((0, n_pad - n), (0, c_pad - c)))
    w_p = jnp.pad(weight.astype(jnp.float32), ((0, 0), (0, c_pad - c)))
    b_p = jnp.pad(bias.astype(jnp.float32), ((0, 0), (0, c_pad - c)))

    # Softmax over the two mixing logits is parameter glue (not the hot path).
    mw = jax.nn.softmax(mean_weight.astype(jnp.float32), axis=0)   # (2,)
    vw = jax.nn.softmax(var_weight.astype(jnp.float32), axis=0)    # (2,)

    kernel = functools.partial(_switch_norm_kernel, eps=float(eps),
                               n_real=float(n), c_real=float(c))

    y_p, mean_bn_p, var_bn_p = pl.pallas_call(
        kernel,
        grid=(2, num_tiles),   # (phase, batch tile)
        out_shape=(
            jax.ShapeDtypeStruct((n_pad, c_pad), x.dtype),
            jax.ShapeDtypeStruct((1, c_pad), jnp.float32),
            jax.ShapeDtypeStruct((1, c_pad), jnp.float32),
        ),
        in_specs=[
            pl.BlockSpec((tile_n, c_pad), lambda p, i: (i, 0)),    # x tile
            pl.BlockSpec((1, c_pad), lambda p, i: (0, 0)),         # weight
            pl.BlockSpec((1, c_pad), lambda p, i: (0, 0)),         # bias
            pl.BlockSpec(memory_space=pltpu.MemorySpace.SMEM),     # softmax(mean_weight)
            pl.BlockSpec(memory_space=pltpu.MemorySpace.SMEM),     # softmax(var_weight)
        ],
        out_specs=(
            # During phase 0 every tile maps to output block 0, so nothing is
            # written back to HBM until phase 1 produces real data.
            pl.BlockSpec((tile_n, c_pad), lambda p, i: (i * p, 0)),
            pl.BlockSpec((1, c_pad), lambda p, i: (0, 0)),   # BN mean (resident)
            pl.BlockSpec((1, c_pad), lambda p, i: (0, 0)),   # BN var  (resident)
        ),
        compiler_params=pltpu.CompilerParams(
            # The BN-stat accumulators and the phase structure are carried
            # across grid steps, so both axes must stay "arbitrary".
            # TODO(synk): on v7x, shard the phase-1 tiles across the 2 TCs with
            # per-core partial BN sums combined via CMEM/VMEM_SHARED.
            dimension_semantics=("arbitrary", "arbitrary"),
            vmem_limit_bytes=32 * 1024 * 1024,
        ),
    )(x_p, w_p, b_p, mw, vw)

    y = y_p[:n, :c]
    mean_bn = mean_bn_p[:, :c]
    var_bn = var_bn_p[:, :c]

    # Buffer update semantics (side effect in PyTorch, functional here).
    if using_moving_average:
        new_rm = momentum * running_mean + (1.0 - momentum) * mean_bn
        new_rv = momentum * running_var + (1.0 - momentum) * var_bn
    else:
        new_rm = running_mean + mean_bn
        new_rv = running_var + mean_bn ** 2 + var_bn
    return y, new_rm, new_rv


def _reference(x, weight, bias, mean_weight, var_weight, eps=1e-5):
    x = x.astype(jnp.float32)
    n, c = x.shape
    mean_ln = jnp.mean(x, axis=1, keepdims=True)
    var_ln = jnp.sum((x - mean_ln) ** 2, axis=1, keepdims=True) / (c - 1)
    mean_bn = jnp.mean(x, axis=0, keepdims=True)
    var_bn = jnp.sum((x - mean_bn) ** 2, axis=0, keepdims=True) / (n - 1)
    mw = jax.nn.softmax(mean_weight, axis=0)
    vw = jax.nn.softmax(var_weight, axis=0)
    mean = mw[0] * mean_ln + mw[1] * mean_bn
    var = vw[0] * var_ln + vw[1] * var_bn
    y = (x - mean) / jnp.sqrt(var + eps)
    return y * weight + bias


if __name__ == "__main__":
    # Module config: SwitchNorm1d(num_features=32); input is 2D (batch, features).
    batch, num_features = 8, 32
    key = jax.random.PRNGKey(0)
    kx, kmw, kvw, kx2 = jax.random.split(key, 4)

    x = jax.random.normal(kx, (batch, num_features), dtype=jnp.float32)

    # Parameters matching reset_parameters(); give the mixing logits small
    # non-trivial values so both LN and BN branches matter.
    weight = jnp.ones((1, num_features), jnp.float32)
    bias = jnp.zeros((1, num_features), jnp.float32)
    mean_weight = jnp.ones((2,), jnp.float32) + 0.1 * jax.random.normal(kmw, (2,))
    var_weight = jnp.ones((2,), jnp.float32) + 0.1 * jax.random.normal(kvw, (2,))
    running_mean = jnp.zeros((1, num_features), jnp.float32)
    running_var = jnp.zeros((1, num_features), jnp.float32)

    y, new_rm, new_rv = switch_norm_1d(
        x, weight, bias, mean_weight, var_weight, running_mean, running_var)
    jax.block_until_ready((y, new_rm, new_rv))

    y_ref = _reference(x, weight, bias, mean_weight, var_weight)
    assert jnp.allclose(y, y_ref, atol=1e-4, rtol=1e-4), "mismatch vs reference"

    # Running-stat update check against reference BN moments.
    mean_bn_ref = jnp.mean(x, axis=0, keepdims=True)
    var_bn_ref = jnp.sum((x - mean_bn_ref) ** 2, axis=0, keepdims=True) / (batch - 1)
    rm_ref = 0.997 * running_mean + (1.0 - 0.997) * mean_bn_ref
    rv_ref = 0.997 * running_var + (1.0 - 0.997) * var_bn_ref
    assert jnp.allclose(new_rm, rm_ref, atol=1e-5, rtol=1e-5), "running_mean mismatch"
    assert jnp.allclose(new_rv, rv_ref, atol=1e-5, rtol=1e-5), "running_var mismatch"

    # Ragged shape: exercises row/column padding and the multi-tile grid path.
    x2 = jax.random.normal(kx2, (600, 50), dtype=jnp.float32)
    w2 = jnp.full((1, 50), 1.3, jnp.float32)
    b2 = jnp.full((1, 50), 0.2, jnp.float32)
    y2, _, _ = switch_norm_1d(x2, w2, b2, mean_weight, var_weight,
                              jnp.zeros((1, 50), jnp.float32),
                              jnp.zeros((1, 50), jnp.float32))
    jax.block_until_ready(y2)
    y2_ref = _reference(x2, w2, b2, mean_weight, var_weight)
    assert jnp.allclose(y2, y2_ref, atol=1e-4, rtol=1e-4), "ragged mismatch"

    print("KERNEL_OK")
</pallas_src>

<mosaic_0001>
module attributes {stable_mosaic.version = 11 : i64} {
  func.func @_switch_norm_kernel(%arg0: i32, %arg1: i32, %arg2: memref<8x128xf32, #tpu.memory_space<vmem>>, %arg3: memref<1x128xf32, #tpu.memory_space<vmem>>, %arg4: memref<1x128xf32, #tpu.memory_space<vmem>>, %arg5: memref<2xf32, #tpu.memory_space<smem>>, %arg6: memref<2xf32, #tpu.memory_space<smem>>, %arg7: memref<8x128xf32, #tpu.memory_space<vmem>>, %arg8: memref<1x128xf32, #tpu.memory_space<vmem>>, %arg9: memref<1x128xf32, #tpu.memory_space<vmem>>) attributes {dimension_semantics = [#tpu.dimension_semantics<arbitrary>, #tpu.dimension_semantics<arbitrary>], iteration_bounds = array<i64: 2, 1>, scalar_prefetch = 0 : i64, scratch_operands = 0 : i64, tpu.core_type = #tpu.core_type<tc>, window_params = [{transform_indices = @transform_0, window_bounds = array<i64: 8, 128>}, {pipeline_mode = #tpu.pipeline_mode<synchronous>, transform_indices = @transform_1, window_bounds = array<i64: 1, 128>}, {pipeline_mode = #tpu.pipeline_mode<synchronous>, transform_indices = @transform_2, window_bounds = array<i64: 1, 128>}, {transform_indices = @transform_3, window_bounds = array<i64: 2>}, {transform_indices = @transform_4, window_bounds = array<i64: 2>}, {transform_indices = @transform_5, window_bounds = array<i64: 8, 128>}, {pipeline_mode = #tpu.pipeline_mode<synchronous>, transform_indices = @transform_6, window_bounds = array<i64: 1, 128>}, {pipeline_mode = #tpu.pipeline_mode<synchronous>, transform_indices = @transform_7, window_bounds = array<i64: 1, 128>}]} {
    %c0_i32 = arith.constant 0 : i32
    %0 = arith.cmpi eq, %arg0, %c0_i32 : i32
    %1 = arith.extui %0 : i1 to i32
    %c0_i32_0 = arith.constant 0 : i32
    %2 = arith.cmpi ne, %1, %c0_i32_0 : i32
    scf.if %2 {
      %c0_i32_2 = arith.constant 0 : i32
      %6 = arith.cmpi eq, %arg1, %c0_i32_2 : i32
      %7 = arith.extui %6 : i1 to i32
      %c0_i32_3 = arith.constant 0 : i32
      %8 = arith.cmpi ne, %7, %c0_i32_3 : i32
      scf.if %8 {
        %cst_14 = arith.constant 0.000000e+00 : f32
        %21 = vector.broadcast %cst_14 : f32 to vector<1x128xf32>
        %c0_15 = arith.constant 0 : index
        %c0_16 = arith.constant 0 : index
        %22 = vector.load %arg8[%c0_15, %c0_16] : memref<1x128xf32, #tpu.memory_space<vmem>>, vector<1x128xf32>
        tpu.vector_store %arg8[%c0_15, %c0_16], %21 {strides = array<i32>} : memref<1x128xf32, #tpu.memory_space<vmem>>, vector<1x128xf32>,
        %cst_17 = arith.constant 0.000000e+00 : f32
        %23 = vector.broadcast %cst_17 : f32 to vector<1x128xf32>
        %c0_18 = arith.constant 0 : index
        %c0_19 = arith.constant 0 : index
        %24 = vector.load %arg9[%c0_18, %c0_19] : memref<1x128xf32, #tpu.memory_space<vmem>>, vector<1x128xf32>
        tpu.vector_store %arg9[%c0_18, %c0_19], %23 {strides = array<i32>} : memref<1x128xf32, #tpu.memory_space<vmem>>, vector<1x128xf32>,
      } else {
      }
      %c0 = arith.constant 0 : index
      %c0_4 = arith.constant 0 : index
      %9 = vector.load %arg2[%c0, %c0_4] : memref<8x128xf32, #tpu.memory_space<vmem>>, vector<8x128xf32>
      %c0_5 = arith.constant 0 : index
      %c0_6 = arith.constant 0 : index
      %10 = vector.load %arg8[%c0_5, %c0_6] : memref<1x128xf32, #tpu.memory_space<vmem>>, vector<1x128xf32>
      %cst = arith.constant dense<0.000000e+00> : vector<128xf32>
      %11 = vector.multi_reduction <add>, %9, %cst [0] : vector<8x128xf32> to vector<128xf32>
      %12 = vector.shape_cast %11 : vector<128xf32> to vector<1x128xf32>
      %13 = arith.addf %10, %12 : vector<1x128xf32>
      %c0_7 = arith.constant 0 : index
      %c0_8 = arith.constant 0 : index
      %14 = vector.load %arg8[%c0_7, %c0_8] : memref<1x128xf32, #tpu.memory_space<vmem>>, vector<1x128xf32>
      tpu.vector_store %arg8[%c0_7, %c0_8], %13 {strides = array<i32>} : memref<1x128xf32, #tpu.memory_space<vmem>>, vector<1x128xf32>,
      %c0_9 = arith.constant 0 : index
      %c0_10 = arith.constant 0 : index
      %15 = vector.load %arg9[%c0_9, %c0_10] : memref<1x128xf32, #tpu.memory_space<vmem>>, vector<1x128xf32>
      %16 = arith.mulf %9, %9 : vector<8x128xf32>
      %cst_11 = arith.constant dense<0.000000e+00> : vector<128xf32>
      %17 = vector.multi_reduction <add>, %16, %cst_11 [0] : vector<8x128xf32> to vector<128xf32>
      %18 = vector.shape_cast %17 : vector<128xf32> to vector<1x128xf32>
      %19 = arith.addf %15, %18 : vector<1x128xf32>
      %c0_12 = arith.constant 0 : index
      %c0_13 = arith.constant 0 : index
      %20 = vector.load %arg9[%c0_12, %c0_13] : memref<1x128xf32, #tpu.memory_space<vmem>>, vector<1x128xf32>
      tpu.vector_store %arg9[%c0_12, %c0_13], %19 {strides = array<i32>} : memref<1x128xf32, #tpu.memory_space<vmem>>, vector<1x128xf32>,
    } else {
    }
    %c1_i32 = arith.constant 1 : i32
    %3 = arith.cmpi eq, %arg0, %c1_i32 : i32
    %4 = arith.extui %3 : i1 to i32
    %c0_i32_1 = arith.constant 0 : i32
    %5 = arith.cmpi ne, %4, %c0_i32_1 : i32
    scf.if %5 {
      %c0_i32_2 = arith.constant 0 : i32
      %6 = arith.cmpi eq, %arg1, %c0_i32_2 : i32
      %7 = arith.extui %6 : i1 to i32
      %c0_i32_3 = arith.constant 0 : i32
      %8 = arith.cmpi ne, %7, %c0_i32_3 : i32
      scf.if %8 {
        %c0_24 = arith.constant 0 : index
        %c0_25 = arith.constant 0 : index
        %57 = vector.load %arg8[%c0_24, %c0_25] : memref<1x128xf32, #tpu.memory_space<vmem>>, vector<1x128xf32>
        %c0_26 = arith.constant 0 : index
        %c0_27 = arith.constant 0 : index
        %58 = vector.load %arg9[%c0_26, %c0_27] : memref<1x128xf32, #tpu.memory_space<vmem>>, vector<1x128xf32>
        %cst_28 = arith.constant 1.250000e-01 : f32
        %59 = vector.broadcast %cst_28 : f32 to vector<1x128xf32>
        %60 = arith.mulf %57, %59 : vector<1x128xf32>
        %cst_29 = arith.constant 8.000000e+00 : f32
        %61 = vector.broadcast %cst_29 : f32 to vector<1x128xf32>
        %62 = arith.mulf %61, %60 : vector<1x128xf32>
        %63 = arith.mulf %62, %60 : vector<1x128xf32>
        %64 = arith.subf %58, %63 : vector<1x128xf32>
        %cst_30 = arith.constant 0.142857149 : f32
        %65 = vector.broadcast %cst_30 : f32 to vector<1x128xf32>
        %66 = arith.mulf %64, %65 : vector<1x128xf32>
        %c0_31 = arith.constant 0 : index
        %c0_32 = arith.constant 0 : index
        %67 = vector.load %arg8[%c0_31, %c0_32] : memref<1x128xf32, #tpu.memory_space<vmem>>, vector<1x128xf32>
        tpu.vector_store %arg8[%c0_31, %c0_32], %60 {strides = array<i32>} : memref<1x128xf32, #tpu.memory_space<vmem>>, vector<1x128xf32>,
        %cst_33 = arith.constant 0.000000e+00 : f32
        %68 = vector.broadcast %cst_33 : f32 to vector<1x128xf32>
        %69 = arith.maximumf %66, %68 : vector<1x128xf32>
        %c0_34 = arith.constant 0 : index
        %c0_35 = arith.constant 0 : index
        %70 = vector.load %arg9[%c0_34, %c0_35] : memref<1x128xf32, #tpu.memory_space<vmem>>, vector<1x128xf32>
        tpu.vector_store %arg9[%c0_34, %c0_35], %69 {strides = array<i32>} : memref<1x128xf32, #tpu.memory_space<vmem>>, vector<1x128xf32>,
      } else {
      }
      %c0 = arith.constant 0 : index
      %c0_4 = arith.constant 0 : index
      %9 = vector.load %arg2[%c0, %c0_4] : memref<8x128xf32, #tpu.memory_space<vmem>>, vector<8x128xf32>
      %cst = arith.constant dense<0.000000e+00> : vector<8xf32>
      %10 = vector.multi_reduction <add>, %9, %cst [1] : vector<8x128xf32> to vector<8xf32>
      %11 = vector.shape_cast %10 : vector<8xf32> to vector<8x1xf32>
      %12 = arith.mulf %9, %9 : vector<8x128xf32>
      %cst_5 = arith.constant dense<0.000000e+00> : vector<8xf32>
      %13 = vector.multi_reduction <add>, %12, %cst_5 [1] : vector<8x128xf32> to vector<8xf32>
      %14 = vector.shape_cast %13 : vector<8xf32> to vector<8x1xf32>
      %cst_6 = arith.constant 3.125000e-02 : f32
      %15 = vector.broadcast %cst_6 : f32 to vector<8x1xf32>
      %16 = arith.mulf %11, %15 : vector<8x1xf32>
      %cst_7 = arith.constant 3.200000e+01 : f32
      %17 = vector.broadcast %cst_7 : f32 to vector<8x1xf32>
      %18 = arith.mulf %17, %16 : vector<8x1xf32>
      %19 = arith.mulf %18, %16 : vector<8x1xf32>
      %20 = arith.subf %14, %19 : vector<8x1xf32>
      %cst_8 = arith.constant 0.0322580636 : f32
      %21 = vector.broadcast %cst_8 : f32 to vector<8x1xf32>
      %22 = arith.mulf %20, %21 : vector<8x1xf32>
      %cst_9 = arith.constant 0.000000e+00 : f32
      %23 = vector.broadcast %cst_9 : f32 to vector<8x1xf32>
      %24 = arith.maximumf %22, %23 : vector<8x1xf32>
      %c0_10 = arith.constant 0 : index
      %25 = memref.load %arg5[%c0_10] : memref<2xf32, #tpu.memory_space<smem>>
      %c1 = arith.constant 1 : index
      %26 = memref.load %arg5[%c1] : memref<2xf32, #tpu.memory_space<smem>>
      %c0_11 = arith.constant 0 : index
      %27 = memref.load %arg6[%c0_11] : memref<2xf32, #tpu.memory_space<smem>>
      %c1_12 = arith.constant 1 : index
      %28 = memref.load %arg6[%c1_12] : memref<2xf32, #tpu.memory_space<smem>>
      %29 = vector.broadcast %25 : f32 to vector<8x1xf32>
      %30 = arith.mulf %29, %16 : vector<8x1xf32>
      %c0_13 = arith.constant 0 : index
      %c0_14 = arith.constant 0 : index
      %31 = vector.load %arg8[%c0_13, %c0_14] : memref<1x128xf32, #tpu.memory_space<vmem>>, vector<1x128xf32>
      %32 = vector.broadcast %26 : f32 to vector<1x128xf32>
      %33 = arith.mulf %32, %31 : vector<1x128xf32>
      %34 = vector.broadcast %30 : vector<8x1xf32> to vector<8x128xf32>
      %35 = vector.broadcast %33 : vector<1x128xf32> to vector<8x128xf32>
      %36 = arith.addf %34, %35 : vector<8x128xf32>
      %37 = vector.broadcast %27 : f32 to vector<8x1xf32>
      %38 = arith.mulf %37, %24 : vector<8x1xf32>
      %c0_15 = arith.constant 0 : index
      %c0_16 = arith.constant 0 : index
      %39 = vector.load %arg9[%c0_15, %c0_16] : memref<1x128xf32, #tpu.memory_space<vmem>>, vector<1x128xf32>
      %40 = vector.broadcast %28 : f32 to vector<1x128xf32>
      %41 = arith.mulf %40, %39 : vector<1x128xf32>
      %42 = vector.broadcast %38 : vector<8x1xf32> to vector<8x128xf32>
      %43 = vector.broadcast %41 : vector<1x128xf32> to vector<8x128xf32>
      %44 = arith.addf %42, %43 : vector<8x128xf32>
      %45 = arith.subf %9, %36 : vector<8x128xf32>
      %cst_17 = arith.constant 9.99999974E-6 : f32
      %46 = vector.broadcast %cst_17 : f32 to vector<8x128xf32>
      %47 = arith.addf %44, %46 : vector<8x128xf32>
      %48 = math.rsqrt %47 : vector<8x128xf32>
      %49 = arith.mulf %45, %48 : vector<8x128xf32>
      %c0_18 = arith.constant 0 : index
      %c0_19 = arith.constant 0 : index
      %50 = vector.load %arg3[%c0_18, %c0_19] : memref<1x128xf32, #tpu.memory_space<vmem>>, vector<1x128xf32>
      %51 = vector.broadcast %50 : vector<1x128xf32> to vector<8x128xf32>
      %52 = arith.mulf %49, %51 : vector<8x128xf32>
      %c0_20 = arith.constant 0 : index
      %c0_21 = arith.constant 0 : index
      %53 = vector.load %arg4[%c0_20, %c0_21] : memref<1x128xf32, #tpu.memory_space<vmem>>, vector<1x128xf32>
      %54 = vector.broadcast %53 : vector<1x128xf32> to vector<8x128xf32>
      %55 = arith.addf %52, %54 : vector<8x128xf32>
      %c0_22 = arith.constant 0 : index
      %c0_23 = arith.constant 0 : index
      %56 = vector.load %arg7[%c0_22, %c0_23] : memref<8x128xf32, #tpu.memory_space<vmem>>, vector<8x128xf32>
      tpu.vector_store %arg7[%c0_22, %c0_23], %55 {strides = array<i32>} : memref<8x128xf32, #tpu.memory_space<vmem>>, vector<8x128xf32>,
    } else {
    }
    return
  }
  func.func @transform_0(%arg0: i32, %arg1: i32) -> (i32, i32) {
    %c0_i32 = arith.constant 0 : i32
    %c0_i32_0 = arith.constant 0 : i32
    return %arg1, %c0_i32 : i32, i32
  }
  func.func @transform_1(%arg0: i32, %arg1: i32) -> (i32, i32) {
    %c0_i32 = arith.constant 0 : i32
    %c0_i32_0 = arith.constant 0 : i32
    %c0_i32_1 = arith.constant 0 : i32
    return %c0_i32, %c0_i32_0 : i32, i32
  }
  func.func @transform_2(%arg0: i32, %arg1: i32) -> (i32, i32) {
    %c0_i32 = arith.constant 0 : i32
    %c0_i32_0 = arith.constant 0 : i32
    %c0_i32_1 = arith.constant 0 : i32
    return %c0_i32, %c0_i32_0 : i32, i32
  }
  func.func @transform_3(%arg0: i32, %arg1: i32) -> i32 {
    %c0_i32 = arith.constant 0 : i32
    %c0_i32_0 = arith.constant 0 : i32
    return %c0_i32 : i32
  }
  func.func @transform_4(%arg0: i32, %arg1: i32) -> i32 {
    %c0_i32 = arith.constant 0 : i32
    %c0_i32_0 = arith.constant 0 : i32
    return %c0_i32 : i32
  }
  func.func @transform_5(%arg0: i32, %arg1: i32) -> (i32, i32) {
    %0 = arith.muli %arg1, %arg0 : i32
    %c0_i32 = arith.constant 0 : i32
    %c0_i32_0 = arith.constant 0 : i32
    return %0, %c0_i32 : i32, i32
  }
  func.func @transform_6(%arg0: i32, %arg1: i32) -> (i32, i32) {
    %c0_i32 = arith.constant 0 : i32
    %c0_i32_0 = arith.constant 0 : i32
    %c0_i32_1 = arith.constant 0 : i32
    return %c0_i32, %c0_i32_0 : i32, i32
  }
  func.func @transform_7(%arg0: i32, %arg1: i32) -> (i32, i32) {
    %c0_i32 = arith.constant 0 : i32
    %c0_i32_0 = arith.constant 0 : i32
    %c0_i32_1 = arith.constant 0 : i32
    return %c0_i32, %c0_i32_0 : i32, i32
  }
}

</mosaic_0001>

<llo_original>
// kernel: tpu_custom_call.1
$region0: #{tpu_custom_call.1}
  #allocation0 [shape = 'u32[]', space=smem, size = 0x4, offset = 0x4, fixed_abs, tag = 'smem constant byte address 0x4 - core index']
  #allocation1 [shape = 'u32[144,128]{1,0:T(1,128)}', space=vmem, size = 0x12000, scoped, tag = 'internal scratch']
  %s0 = inlined_call_operand.hbm [shape: f32[8,128], index: 0, kind: input, shape index: {}]
  %s1 = inlined_call_operand.vmem [shape: f32[1,128], index: 1, kind: input, shape index: {}]
  %s2 = inlined_call_operand.vmem [shape: f32[1,128], index: 2, kind: input, shape index: {}]
  %s3 = inlined_call_operand.vmem [shape: f32[2], index: 3, kind: input, shape index: {}]
  %s4 = inlined_call_operand.vmem [shape: f32[2], index: 4, kind: input, shape index: {}]
  %s5 = inlined_call_operand.hbm [shape: f32[8,128], index: 5, kind: output, shape index: {0}]
  %s6 = inlined_call_operand.hbm [shape: f32[1,128], index: 6, kind: output, shape index: {1}]
  %s7 = inlined_call_operand.hbm [shape: f32[1,128], index: 7, kind: output, shape index: {2}]
  %8 = xla_tuple %s5, %s6, %s7
  %s9 = sld [smem:[#allocation0]]
  $region97: #{tpu_custom_call.1} parent=0
    _
  %s11 = ssub.s32 1, %s9
  %s12 = scalar_select 0, %s11, %s9
  $region1: #{tpu_custom_call.1} parent=0
    #allocation2 [shape = 'u8[4096]{0}', space=vmem, size = 0x1000, scoped, tag = 'input window, operand 0, single buffered']
    #allocation3 [shape = 's32[2]{0}', space=sflag, size = 0x8, scoped, tag = 'scoped memory for tpu_custom_call.1']
    #allocation4 [shape = 's32[2]{0}', space=sflag, size = 0x8, scoped, tag = 'scoped memory for tpu_custom_call.1']
    #allocation5 [shape = 's32[2]{0}', space=sflag, size = 0x8, scoped, tag = 'scoped memory for tpu_custom_call.1']
    #allocation6 [shape = 'u8[512]{0}', space=smem, size = 0x200, scoped, tag = 'input window, operand 3, single buffered']
    #allocation7 [shape = 'u8[512]{0}', space=smem, size = 0x200, scoped, tag = 'input window, operand 4, single buffered']
    #allocation8 [shape = 's32[1]{0}', space=sflag, size = 0x4, scoped, tag = 'scoped memory for tpu_custom_call.1']
    #allocation9 [shape = 'u8[8192]{0}', space=vmem, size = 0x2000, scoped, tag = 'output window, operand 0']
    #allocation10 [shape = 'u8[512]{0}', space=vmem, size = 0x400, scoped, tag = 'output window, operand 1, single buffered']
    #allocation11 [shape = 's32[1]{0}', space=sflag, size = 0x4, scoped, tag = 'scoped memory for tpu_custom_call.1']
    #allocation12 [shape = 'u8[512]{0}', space=vmem, size = 0x400, scoped, tag = 'output window, operand 2, single buffered']
    %13 = vsyncpa [#allocation3], 0
    %14 = vsyncpa [#allocation5], 0
    %15 = vsyncpa [#allocation8], 0
    %16 = vsyncpa [#allocation4], 0
    %s17 = scalar_lea.sflag [#allocation4], 1
    %18 = vsyncpa %s17, 0
    %19 = vsyncpa [#allocation11], 0
    loop: start=0, step=1, limit=4
    $region2: #{tpu_custom_call.1} parent=1 // loop_pre_header
      _
    $region3: #{tpu_custom_call.1} parent=1 // loop_header
      %s21 = sphi 0, %s25
      %p22 = scmp.ge.s32.totalorder %s21, 4
      %s28 = sphi 0, %s40
      %s29 = sphi 0, %s36
      %s30 = sphi 0, %s28
      %s31 = sphi 0, %s29
      %s32 = sphi 0, %s30
      %s33 = sphi 0, %s31
      %s43 = sphi 0, %s45
      %s46 = sphi 0, %s43
      %s47 = sphi 0, %s46
      %s63 = sphi 0, %s47
      %s67 = sphi 0, %s67
      %s69 = sphi 0, %s67
      %s70 = sphi 0, %s69
      %s84 = sphi 0, %s70
      %s88 = sphi 0, %s88
      %s90 = sphi 0, %s88
      %s91 = sphi 0, %s90
      %s105 = sphi 0, %s91
      %s109 = sphi 0, %s109
      %s111 = sphi 0, %s109
      %s112 = sphi 0, %s111
      %s126 = sphi 0, %s112
      %s130 = sphi 0, %s130
      %s132 = sphi 0, %s130
      %s133 = sphi 0, %s132
      %s147 = sphi 0, %s133
      %s155 = sphi 0, %s157
      %s158 = sphi 0, %s155
      %s159 = sphi 0, %s158
      %s175 = sphi 0, %s159
      %s179 = sphi 0, %s179
      %s181 = sphi 0, %s179
      %s182 = sphi 0, %s181
      %s196 = sphi 0, %s182
      %s200 = sphi 0, %s200
      %s202 = sphi 0, %s200
      %s203 = sphi 0, %s202
      %s217 = sphi 0, %s203
    $region4: #{tpu_custom_call.1} parent=1 // loop_header_branch
      %24 = sbr.rel (%p22) target = $region8
    $region5: #{tpu_custom_call.1} parent=1 // loop_body
      %s26 = ssub.s32 %s21, 1
      %s27 = ssub.s32 %s21, 2
      %s34 = sadd.s32 1, %s29
      %p35 = scmp.ge.s32.totalorder %s34, 1
      %s36 = scalar_select %p35, 0, %s34
      %s37 = sadd.s32 1, %s28
      %s38 = scalar_select %p35, %s37, %s28
      %p39 = scmp.ge.s32.totalorder %s38, 2
      %s40 = scalar_select %p39, 0, %s38
      %s41 = ssub.s32 %s29, %s36
      %p42 = scmp.eq.s32.totalorder %s41, 0
      %s44 = sadd.s32 %s43, 1
      %s45 = scalar_select %p42, %s43, %s44
      %p48 = pneg %p42
      %p49 = scmp.eq.s32.totalorder %s21, 1
      %p50 = por %p48, %p49
      %p51 = scmp.ne.s32.totalorder %s43, %s46
      %p52 = scmp.eq.s32.totalorder %s21, 0
      %p53 = por %p51, %p52
      %p54 = scmp.ne.s32.totalorder %s43, %s46
      %p55 = scmp.eq.s32.totalorder %s26, 1
      %p56 = por %p54, %p55
      %p57 = scmp.ne.s32.totalorder %s46, %s47
      %p58 = scmp.eq.s32.totalorder %s26, 0
      %p59 = por %p57, %p58
      %p60 = scmp.ne.s32.totalorder %s46, %s47
      %p61 = scmp.eq.s32.totalorder %s27, 1
      %p62 = por %p60, %p61
      %p64 = scmp.ne.s32.totalorder %s47, %s63
      %p65 = scmp.eq.s32.totalorder %s27, 0
      %p66 = por %p64, %p65
      %s68 = sadd.s32 %s67, 1
      %p71 = scmp.eq.s32.totalorder %s21, 1
      %p72 = scmp.ne.s32.totalorder %s67, %s69
      %p73 = scmp.eq.s32.totalorder %s21, 0
      %p74 = por %p72, %p73
      %p75 = scmp.ne.s32.totalorder %s67, %s69
      %p76 = scmp.eq.s32.totalorder %s26, 1
      %p77 = por %p75, %p76
      %p78 = scmp.ne.s32.totalorder %s69, %s70
      %p79 = scmp.eq.s32.totalorder %s26, 0
      %p80 = por %p78, %p79
      %p81 = scmp.ne.s32.totalorder %s69, %s70
      %p82 = scmp.eq.s32.totalorder %s27, 1
      %p83 = por %p81, %p82
      %p85 = scmp.ne.s32.totalorder %s70, %s84
      %p86 = scmp.eq.s32.totalorder %s27, 0
      %p87 = por %p85, %p86
      %s89 = sadd.s32 %s88, 1
      %p92 = scmp.eq.s32.totalorder %s21, 1
      %p93 = scmp.ne.s32.totalorder %s88, %s90
      %p94 = scmp.eq.s32.totalorder %s21, 0
      %p95 = por %p93, %p94
      %p96 = scmp.ne.s32.totalorder %s88, %s90
      %p97 = scmp.eq.s32.totalorder %s26, 1
      %p98 = por %p96, %p97
      %p99 = scmp.ne.s32.totalorder %s90, %s91
      %p100 = scmp.eq.s32.totalorder %s26, 0
      %p101 = por %p99, %p100
      %p102 = scmp.ne.s32.totalorder %s90, %s91
      %p103 = scmp.eq.s32.totalorder %s27, 1
      %p104 = por %p102, %p103
      %p106 = scmp.ne.s32.totalorder %s91, %s105
      %p107 = scmp.eq.s32.totalorder %s27, 0
      %p108 = por %p106, %p107
      %s110 = sadd.s32 %s109, 1
      %p113 = scmp.eq.s32.totalorder %s21, 1
      %p114 = scmp.ne.s32.totalorder %s109, %s111
      %p115 = scmp.eq.s32.totalorder %s21, 0
      %p116 = por %p114, %p115
      %p117 = scmp.ne.s32.totalorder %s109, %s111
      %p118 = scmp.eq.s32.totalorder %s26, 1
      %p119 = por %p117, %p118
      %p120 = scmp.ne.s32.totalorder %s111, %s112
      %p121 = scmp.eq.s32.totalorder %s26, 0
      %p122 = por %p120, %p121
      %p123 = scmp.ne.s32.totalorder %s111, %s112
      %p124 = scmp.eq.s32.totalorder %s27, 1
      %p125 = por %p123, %p124
      %p127 = scmp.ne.s32.totalorder %s112, %s126
      %p128 = scmp.eq.s32.totalorder %s27, 0
      %p129 = por %p127, %p128
      %s131 = sadd.s32 %s130, 1
      %p134 = scmp.eq.s32.totalorder %s21, 1
      %p135 = scmp.ne.s32.totalorder %s130, %s132
      %p136 = scmp.eq.s32.totalorder %s21, 0
      %p137 = por %p135, %p136
      %p138 = scmp.ne.s32.totalorder %s130, %s132
      %p139 = scmp.eq.s32.totalorder %s26, 1
      %p140 = por %p138, %p139
      %p141 = scmp.ne.s32.totalorder %s132, %s133
      %p142 = scmp.eq.s32.totalorder %s26, 0
      %p143 = por %p141, %p142
      %p144 = scmp.ne.s32.totalorder %s132, %s133
      %p145 = scmp.eq.s32.totalorder %s27, 1
      %p146 = por %p144, %p145
      %p148 = scmp.ne.s32.totalorder %s133, %s147
      %p149 = scmp.eq.s32.totalorder %s27, 0
      %p150 = por %p148, %p149
      %s151 = smul.u32 %s29, %s28
      %s152 = smul.u32 %s36, %s40
      %s153 = ssub.s32 %s151, %s152
      %p154 = scmp.eq.s32.totalorder %s153, 0
      %s156 = sadd.s32 %s155, 1
      %s157 = scalar_select %p154, %s155, %s156
      %p160 = pneg %p154
      %p161 = scmp.eq.s32.totalorder %s21, 1
      %p162 = por %p160, %p161
      %p163 = scmp.ne.s32.totalorder %s155, %s158
      %p164 = scmp.eq.s32.totalorder %s21, 0
      %p165 = por %p163, %p164
      %p166 = scmp.ne.s32.totalorder %s155, %s158
      %p167 = scmp.eq.s32.totalorder %s26, 1
      %p168 = por %p166, %p167
      %p169 = scmp.ne.s32.totalorder %s158, %s159
      %p170 = scmp.eq.s32.totalorder %s26, 0
      %p171 = por %p169, %p170
      %p172 = scmp.ne.s32.totalorder %s158, %s159
      %p173 = scmp.eq.s32.totalorder %s27, 1
      %p174 = por %p172, %p173
      %p176 = scmp.ne.s32.totalorder %s159, %s175
      %p177 = scmp.eq.s32.totalorder %s27, 0
      %p178 = por %p176, %p177
      %s180 = sadd.s32 %s179, 1
      %p183 = scmp.eq.s32.totalorder %s21, 1
      %p184 = scmp.ne.s32.totalorder %s179, %s181
      %p185 = scmp.eq.s32.totalorder %s21, 0
      %p186 = por %p184, %p185
      %p187 = scmp.ne.s32.totalorder %s179, %s181
      %p188 = scmp.eq.s32.totalorder %s26, 1
      %p189 = por %p187, %p188
      %p190 = scmp.ne.s32.totalorder %s181, %s182
      %p191 = scmp.eq.s32.totalorder %s26, 0
      %p192 = por %p190, %p191
      %p193 = scmp.ne.s32.totalorder %s181, %s182
      %p194 = scmp.eq.s32.totalorder %s27, 1
      %p195 = por %p193, %p194
      %p197 = scmp.ne.s32.totalorder %s182, %s196
      %p198 = scmp.eq.s32.totalorder %s27, 0
      %p199 = por %p197, %p198
      %s201 = sadd.s32 %s200, 1
      %p204 = scmp.eq.s32.totalorder %s21, 1
      %p205 = scmp.ne.s32.totalorder %s200, %s202
      %p206 = scmp.eq.s32.totalorder %s21, 0
      %p207 = por %p205, %p206
      %p208 = scmp.ne.s32.totalorder %s200, %s202
      %p209 = scmp.eq.s32.totalorder %s26, 1
      %p210 = por %p208, %p209
      %p211 = scmp.ne.s32.totalorder %s202, %s203
      %p212 = scmp.eq.s32.totalorder %s26, 0
      %p213 = por %p211, %p212
      %p214 = scmp.ne.s32.totalorder %s202, %s203
      %p215 = scmp.eq.s32.totalorder %s27, 1
      %p216 = por %p214, %p215
      %p218 = scmp.ne.s32.totalorder %s203, %s217
      %p219 = scmp.eq.s32.totalorder %s27, 0
      %p220 = por %p218, %p219
      %p221 = scmp.le.s32.totalorder 1, %s21
      %p222 = scmp.lt.s32.totalorder %s21, 3
      %p223 = pnand %p221, %p222
      %p224 = pneg %p223
      // Predicated region
      $region9: #{tpu_custom_call.1} parent=5 // pred_check
        _
      $region10: #{tpu_custom_call.1} parent=5 // pred_check_branch
        %226 = sbr.rel (%p223) target = $region12
      $region11: #{tpu_custom_call.1} parent=5 // pred_region
        %s227 = ssub.s32 %s21, 1
        // Predicated region
        $region13: #{tpu_custom_call.1} parent=11 // pred_check
          %p228 = pneg %p59
        $region14: #{tpu_custom_call.1} parent=11 // pred_check_branch
          %230 = sbr.rel (%p228) target = $region16
        $region15: #{tpu_custom_call.1} parent=11 // pred_region
          %s232 = ssub.s32 128, 128
          %233 = vsyncadd [#allocation3], %s232
          %s234 = smul.addr %s31, 128
          %s235 = scalar_lea.hbm %s0, %s234
          %s237 = sshll.u32 [#allocation2], 4
          %s238 = int_to_ptr.vmem [resolvable:$true] %s237
          %240 = dma.hbm_to_vmem [thread:$0]  %s235, 128, %s238, [#allocation3]
        $region16: #{tpu_custom_call.1} parent=11 // pred_fallthru
          _
        // Predicated region
        $region17: #{tpu_custom_call.1} parent=11 // pred_check
          %p241 = pneg %p80
        $region18: #{tpu_custom_call.1} parent=11 // pred_check_branch
          %243 = sbr.rel (%p241) target = $region20
        $region19: #{tpu_custom_call.1} parent=11 // pred_region
          _
        $region20: #{tpu_custom_call.1} parent=11 // pred_fallthru
          _
        // Predicated region
        $region21: #{tpu_custom_call.1} parent=11 // pred_check
          %p244 = pneg %p101
        $region22: #{tpu_custom_call.1} parent=11 // pred_check_branch
          %246 = sbr.rel (%p244) target = $region24
        $region23: #{tpu_custom_call.1} parent=11 // pred_region
          _
        $region24: #{tpu_custom_call.1} parent=11 // pred_fallthru
          _
        // Predicated region
        $region25: #{tpu_custom_call.1} parent=11 // pred_check
          %p247 = pneg %p122
        $region26: #{tpu_custom_call.1} parent=11 // pred_check_branch
          %249 = sbr.rel (%p247) target = $region28
        $region27: #{tpu_custom_call.1} parent=11 // pred_region
          %s251 = ssub.s32 16, 16
          %252 = vsyncadd [#allocation5], %s251
          %s254 = sshll.u32 %s3, 4
          %s255 = int_to_ptr.vmem [resolvable:$true] %s254
          %257 = dma.vmem_to_smem %s255, 16, [#allocation6], [#allocation5]
        $region28: #{tpu_custom_call.1} parent=11 // pred_fallthru
          _
        // Predicated region
        $region29: #{tpu_custom_call.1} parent=11 // pred_check
          %p258 = pneg %p143
        $region30: #{tpu_custom_call.1} parent=11 // pred_check_branch
          %260 = sbr.rel (%p258) target = $region32
        $region31: #{tpu_custom_call.1} parent=11 // pred_region
          %s262 = ssub.s32 16, 16
          %263 = vsyncadd [#allocation8], %s262
          %s265 = sshll.u32 %s4, 4
          %s266 = int_to_ptr.vmem [resolvable:$true] %s265
          %268 = dma.vmem_to_smem %s266, 16, [#allocation7], [#allocation8]
        $region32: #{tpu_custom_call.1} parent=11 // pred_fallthru
          _
      $region12: #{tpu_custom_call.1} parent=5 // pred_fallthru
        _
      %p269 = scmp.lt.s32.totalorder %s21, 2
      // Predicated region
      $region33: #{tpu_custom_call.1} parent=5 // pred_check
        %p270 = pneg %p269
      $region34: #{tpu_custom_call.1} parent=5 // pred_check_branch
        %272 = sbr.rel (%p270) target = $region36
      $region35: #{tpu_custom_call.1} parent=5 // pred_region
        _
      $region36: #{tpu_custom_call.1} parent=5 // pred_fallthru
        _
      %p273 = scmp.le.s32.totalorder 1, %s21
      %p274 = scmp.lt.s32.totalorder %s21, 3
      %p275 = pnand %p273, %p274
      %p276 = pneg %p275
      // Predicated region
      $region37: #{tpu_custom_call.1} parent=5 // pred_check
        _
      $region38: #{tpu_custom_call.1} parent=5 // pred_check_branch
        %278 = sbr.rel (%p275) target = $region40
      $region39: #{tpu_custom_call.1} parent=5 // pred_region
        %s279 = ssub.s32 %s21, 1
        // Predicated region
        $region41: #{tpu_custom_call.1} parent=39 // pred_check
          %p280 = pneg %p59
        $region42: #{tpu_custom_call.1} parent=39 // pred_check_branch
          %282 = sbr.rel (%p280) target = $region44
        $region43: #{tpu_custom_call.1} parent=39 // pred_region
          %283 = dma.done [#allocation3], 128
        $region44: #{tpu_custom_call.1} parent=39 // pred_fallthru
          _
        // Predicated region
        $region45: #{tpu_custom_call.1} parent=39 // pred_check
          %p284 = pneg %p122
        $region46: #{tpu_custom_call.1} parent=39 // pred_check_branch
          %286 = sbr.rel (%p284) target = $region48
        $region47: #{tpu_custom_call.1} parent=39 // pred_region
          %287 = dma.done [#allocation5], 16
        $region48: #{tpu_custom_call.1} parent=39 // pred_fallthru
          _
        // Predicated region
        $region49: #{tpu_custom_call.1} parent=39 // pred_check
          %p288 = pneg %p143
        $region50: #{tpu_custom_call.1} parent=39 // pred_check_branch
          %290 = sbr.rel (%p288) target = $region52
        $region51: #{tpu_custom_call.1} parent=39 // pred_region
          %291 = dma.done [#allocation8], 16
        $region52: #{tpu_custom_call.1} parent=39 // pred_fallthru
          _
        %292 = sfence
        %p293 = pneg %p59
        %p294 = pneg %p56
        %p295 = pneg %p80
        %p296 = pneg %p77
        %p297 = pneg %p101
        %p298 = pneg %p98
        %p299 = pneg %p122
        %p300 = pneg %p119
        %p301 = pneg %p143
        %p302 = pneg %p140
        %p303 = pneg %p171
        %p304 = pneg %p168
        %s305 = sand.u32 %s158, 1
        %s306 = scalar_lea.sflag [#allocation4], %s305
        %s307 = sand.u32 %s158, 1
        %s308 = smul.addr %s307, 8
        %s309 = scalar_lea.vmem [#allocation9], %s308
        %p310 = pneg %p192
        %p311 = pneg %p189
        %p312 = pneg %p213
        %p313 = pneg %p210
        %s314 = smul.u32 %s31, %s30
        %p315 = scmp.eq.s32.totalorder %s30, 0
        // Predicated region
        $region53: #{tpu_custom_call.1} parent=39 // pred_check
          %p316 = pneg %p315
        $region54: #{tpu_custom_call.1} parent=39 // pred_check_branch
          %318 = sbr.rel (%p316) target = $region56
        $region55: #{tpu_custom_call.1} parent=39 // pred_region
          %p319 = scmp.eq.s32.totalorder %s31, 0
          // Predicated region
          $region57: #{tpu_custom_call.1} parent=55 // pred_check
            %p320 = pneg %p319
          $region58: #{tpu_custom_call.1} parent=55 // pred_check_branch
            %322 = sbr.rel (%p320) target = $region60
          $region59: #{tpu_custom_call.1} parent=55 // pred_region
            %323 = vst [vmem:[#allocation10] sm:$0x1] 0.0
            %324 = vst [vmem:[#allocation12] sm:$0x1] 0.0
          $region60: #{tpu_custom_call.1} parent=55 // pred_fallthru
            _
          %v325 = vld [vmem:[#allocation2] sm:$0xff]
          %v326 = vld [vmem:[#allocation10] sm:$0x1]
          %v327 = vrot.slane %v325, 4
          %v328 = vadd.f32 %v325, %v327
          %v329 = vrot.slane %v328, 2
          %v330 = vadd.f32 %v328, %v329
          %v331 = vrot.slane %v330, 1
          %v332 = vadd.f32 %v330, %v331
          %v333 = vadd.f32 %v326, %v332
          %334 = vst [vmem:[#allocation10] sm:$0x1] %v333
          %v335 = vld [vmem:[#allocation12] sm:$0x1]
          %v336 = vmul.f32 %v325, %v325
          %v337 = vrot.slane %v336, 4
          %v338 = vadd.f32 %v336, %v337
          %v339 = vrot.slane %v338, 2
          %v340 = vadd.f32 %v338, %v339
          %v341 = vrot.slane %v340, 1
          %v342 = vadd.f32 %v340, %v341
          %v343 = vadd.f32 %v335, %v342
          %344 = vst [vmem:[#allocation12] sm:$0x1] %v343
        $region56: #{tpu_custom_call.1} parent=39 // pred_fallthru
          _
        %p345 = scmp.eq.s32.totalorder %s30, 1
        // Predicated region
        $region61: #{tpu_custom_call.1} parent=39 // pred_check
          %p346 = pneg %p345
        $region62: #{tpu_custom_call.1} parent=39 // pred_check_branch
          %348 = sbr.rel (%p346) target = $region64
        $region63: #{tpu_custom_call.1} parent=39 // pred_region
          %p349 = scmp.eq.s32.totalorder %s31, 0
          // Predicated region
          $region65: #{tpu_custom_call.1} parent=63 // pred_check
            %p350 = pneg %p349
          $region66: #{tpu_custom_call.1} parent=63 // pred_check_branch
            %352 = sbr.rel (%p350) target = $region68
          $region67: #{tpu_custom_call.1} parent=63 // pred_region
            %v353 = vld [vmem:[#allocation10] sm:$0x1]
            %v354 = vld [vmem:[#allocation12] sm:$0x1]
            %v355 = vmul.f32 %v353, 0.125
            %v356 = vmul.f32 %v355, 8.0
            %v357 = vmul.f32 %v356, %v355
            %v358 = vsub.f32 %v354, %v357
            %v359 = vmul.f32 %v358, 0.14285715
            %360 = vst [vmem:[#allocation10] sm:$0x1] %v355
            %v361 = vmax.f32 %v359, 0.0
            %362 = vst [vmem:[#allocation12] sm:$0x1] %v361
          $region68: #{tpu_custom_call.1} parent=63 // pred_fallthru
            _
          %v363 = vld [vmem:[#allocation2] sm:$0xff]
          %364 = vadd.xlane.f32.xlu0 %v363
          %v365 = vpop.xlane.xlu0 %364
          %v366 = vmul.f32 %v363, %v363
          %367 = vadd.xlane.f32.xlu0 %v366
          %v368 = vpop.xlane.xlu0 %367
          %v369 = vmul.f32 %v365, 0.03125
          %v370 = vmul.f32 %v369, 32.0
          %v371 = vmul.f32 %v370, %v369
          %v372 = vsub.f32 %v368, %v371
          %v373 = vmul.f32 %v372, 0.032258064
          %v374 = vmax.f32 %v373, 0.0
          %s375 = sld [smem:[#allocation6]]
          %s376 = sld [smem:[#allocation6 + $0x1]]
          %s377 = sld [smem:[#allocation7]]
          %s378 = sld [smem:[#allocation7 + $0x1]]
          %v379 = vstv %s375
          %v380 = vmul.f32 %v379, %v369
          %v381 = vld [vmem:[#allocation10] sm:$0x1]
          %v382 = vstv %s376
          %v383 = vmul.f32 %v382, %v381
          %v385 = vlaneseq
          %v386 = vshrl.u32 %v385, 7
          %v387 = vsub.s32 0, %v386
          %v388 = vrot.slane %v383, %v387
          %v390 = vadd.f32 %v380, %v388
          %v391 = vstv %s377
          %v392 = vmul.f32 %v391, %v374
          %v393 = vld [vmem:[#allocation12] sm:$0x1]
          %v394 = vstv %s378
          %v395 = vmul.f32 %v394, %v393
          %v397 = vlaneseq
          %v398 = vshrl.u32 %v397, 7
          %v399 = vsub.s32 0, %v398
          %v400 = vrot.slane %v395, %v399
          %v402 = vadd.f32 %v392, %v400
          %v403 = vsub.f32 %v363, %v390
          %v404 = vadd.f32 %v402, 1e-05
          %v405 = vrsqrt.pop %v404
          %v406 = vmul.f32 %v403, %v405
          %v407 = vld [vmem:[%s1] sm:$0x1]
          %v409 = vlaneseq
          %v410 = vshrl.u32 %v409, 7
          %v411 = vsub.s32 0, %v410
          %v412 = vrot.slane %v407, %v411
          %v414 = vmul.f32 %v406, %v412
          %v415 = vld [vmem:[%s2] sm:$0x1]
          %v417 = vlaneseq
          %v418 = vshrl.u32 %v417, 7
          %v419 = vsub.s32 0, %v418
          %v420 = vrot.slane %v415, %v419
          %v422 = vadd.f32 %v414, %v420
          %423 = vst [vmem:[%s309] sm:$0xff] %v422
        $region64: #{tpu_custom_call.1} parent=39 // pred_fallthru
          _
        %s424 = sand.u32 %s158, 1
        %s425 = scalar_lea.sflag [#allocation4], %s424
        %s426 = sand.u32 %s158, 1
        %s427 = smul.addr %s426, 8
        %s428 = scalar_lea.vmem [#allocation9], %s427
        // Predicated region
        $region69: #{tpu_custom_call.1} parent=39 // pred_check
          %p429 = pneg %p168
        $region70: #{tpu_custom_call.1} parent=39 // pred_check_branch
          %431 = sbr.rel (%p429) target = $region72
        $region71: #{tpu_custom_call.1} parent=39 // pred_region
          %s432 = smul.u32 %s31, %s30
          %s434 = ssub.s32 128, 128
          %435 = vsyncadd %s425, %s434
          %s436 = smul.addr %s432, 128
          %s437 = scalar_lea.hbm %s5, %s436
          %s439 = sshll.u32 %s428, 4
          %s440 = int_to_ptr.vmem [resolvable:$true] %s439
          %442 = dma.vmem_to_hbm [thread:$0]  %s440, 128, %s437, %s425
        $region72: #{tpu_custom_call.1} parent=39 // pred_fallthru
          _
        // Predicated region
        $region73: #{tpu_custom_call.1} parent=39 // pred_check
          %p443 = pneg %p189
        $region74: #{tpu_custom_call.1} parent=39 // pred_check_branch
          %445 = sbr.rel (%p443) target = $region76
        $region75: #{tpu_custom_call.1} parent=39 // pred_region
          %s447 = ssub.s32 16, 16
          %448 = vsyncadd [#allocation11], %s447
          %s450 = sshll.u32 [#allocation10], 4
          %s451 = int_to_ptr.vmem [resolvable:$true] %s450
          %453 = dma.vmem_to_hbm [thread:$0]  %s451, 16, %s6, [#allocation11]
        $region76: #{tpu_custom_call.1} parent=39 // pred_fallthru
          _
        // Predicated region
        $region77: #{tpu_custom_call.1} parent=39 // pred_check
          %p454 = pneg %p210
        $region78: #{tpu_custom_call.1} parent=39 // pred_check_branch
          %456 = sbr.rel (%p454) target = $region80
        $region79: #{tpu_custom_call.1} parent=39 // pred_region
          %s458 = ssub.s32 16, 16
          %459 = vsyncadd [#allocation11], %s458
          %s461 = sshll.u32 [#allocation12], 4
          %s462 = int_to_ptr.vmem [resolvable:$true] %s461
          %464 = dma.vmem_to_hbm [thread:$0]  %s462, 16, %s7, [#allocation11]
        $region80: #{tpu_custom_call.1} parent=39 // pred_fallthru
          _
        // Predicated region
        $region81: #{tpu_custom_call.1} parent=39 // pred_check
          %p465 = pneg %p189
        $region82: #{tpu_custom_call.1} parent=39 // pred_check_branch
          %467 = sbr.rel (%p465) target = $region84
        $region83: #{tpu_custom_call.1} parent=39 // pred_region
          %468 = dma.done [#allocation11], 16
        $region84: #{tpu_custom_call.1} parent=39 // pred_fallthru
          _
        // Predicated region
        $region85: #{tpu_custom_call.1} parent=39 // pred_check
          %p469 = pneg %p210
        $region86: #{tpu_custom_call.1} parent=39 // pred_check_branch
          %471 = sbr.rel (%p469) target = $region88
        $region87: #{tpu_custom_call.1} parent=39 // pred_region
          %472 = dma.done [#allocation11], 16
        $region88: #{tpu_custom_call.1} parent=39 // pred_fallthru
          _
      $region40: #{tpu_custom_call.1} parent=5 // pred_fallthru
        _
      %p473 = scmp.le.s32.totalorder 2, %s21
      // Predicated region
      $region89: #{tpu_custom_call.1} parent=5 // pred_check
        %p474 = pneg %p473
      $region90: #{tpu_custom_call.1} parent=5 // pred_check_branch
        %476 = sbr.rel (%p474) target = $region92
      $region91: #{tpu_custom_call.1} parent=5 // pred_region
        %s477 = ssub.s32 %s21, 2
        // Predicated region
        $region93: #{tpu_custom_call.1} parent=91 // pred_check
          %p478 = pneg %p174
        $region94: #{tpu_custom_call.1} parent=91 // pred_check_branch
          %480 = sbr.rel (%p478) target = $region96
        $region95: #{tpu_custom_call.1} parent=91 // pred_region
          %s481 = sand.u32 %s159, 1
          %s482 = scalar_lea.sflag [#allocation4], %s481
          %s483 = sand.u32 %s159, 1
          %s484 = smul.addr %s483, 8
          %s485 = scalar_lea.vmem [#allocation9], %s484
          %486 = dma.done %s482, 128
        $region96: #{tpu_custom_call.1} parent=91 // pred_fallthru
          _
      $region92: #{tpu_custom_call.1} parent=5 // pred_fallthru
        _
    $region6: #{tpu_custom_call.1} parent=1 // loop_footer
      %s25 = sadd.s32 1, %s21
    $region7: #{tpu_custom_call.1} parent=1 // loop_footer_branch
      %20 = sbr.rel target = $region3
    $region8: #{tpu_custom_call.1} parent=1 // loop_exit
      _
    %487 = vsyncpa [#allocation3], 1
    %s488 = scalar_lea.sflag [#allocation3], 1
    %489 = vsyncpa %s488, 1
    %490 = vsyncpa [#allocation4], 1
    %s491 = scalar_lea.sflag [#allocation4], 1
    %492 = vsyncpa %s491, 1
    %493 = vsyncpa [#allocation11], 1
    %494 = vsyncpa [#allocation5], 1
    %s495 = scalar_lea.sflag [#allocation5], 1
    %496 = vsyncpa %s495, 1
    %497 = vsyncpa [#allocation8], 1

</llo_original>
